<compile_context>
chip_gen: v7x
topology: tpu7x:2x2x1
jax: 0.10.0
libtpu: 0.0.40
codegen_flags: <defaults>
</compile_context>

<pallas_src>
import functools

import jax
import jax.numpy as jnp
from jax.experimental import pallas as pl
from jax.experimental.pallas import tpu as pltpu

_LANE = 128


# ----------------------------- kernels ------------------------------------


def _prologue_kernel(x_ref, w1_ref, b1_ref, gamma_ref, beta_ref,
                     w2_ref, b2_ref, h2_ref, *, bn_eps, n_valid):
    """lin1 -> BatchNorm1d (training stats) -> lin2, written into a
    row-padded, lane-dense [Np, Cp] output (padding rows/lanes = 0)."""
    x = x_ref[...]                                                   # [N, Fin]
    h1 = jnp.dot(x, w1_ref[...],
                 preferred_element_type=jnp.float32) + b1_ref[...]   # [N, H]
    # BatchNorm1d, training mode: biased batch stats over the node axis,
    # variance from centered squares (no E[x^2]-mean^2 cancellation).
    mean = jnp.mean(h1, axis=0, keepdims=True)
    centered = h1 - mean
    var = jnp.mean(centered * centered, axis=0, keepdims=True)
    h1n = (gamma_ref[...] * centered * jax.lax.rsqrt(var + bn_eps)
           + beta_ref[...])
    h2 = jnp.dot(h1n, w2_ref[...],
                 preferred_element_type=jnp.float32) + b2_ref[...]   # [N, Cp]
    h2_ref[...] = jnp.zeros_like(h2_ref)       # zero the padding rows
    h2_ref[0:n_valid, :] = h2


def _fused_prop_kernel(adj_ref, h2_ref, emb_ref, out_ref, z_ref, *,
                       alpha, num_classes, tm, np_, adj_resident):
    """All K APPNP hops in one call.

    grid = (K, num_row_tiles); K outer ("arbitrary", sequential dependence),
    row tiles inner. z ping-pongs between the two [np_, Cp] halves of the
    bf16 VMEM scratch `z_ref` (shape [2*np_, Cp]); h2 / emb / out are
    invariant-resident full arrays, adjacency is either invariant-resident
    ([np_, np_]) or a streamed [tm, np_] row tile.
    """
    k = pl.program_id(0)
    i = pl.program_id(1)
    last_hop = pl.num_programs(0) - 1
    row = pl.multiple_of(i * tm, tm)

    # Hop 0 initialization: z_0 = h2 (bf16 carry), written once.
    @pl.when(jnp.logical_and(k == 0, i == 0))
    def _():
        z_ref[0:np_, :] = h2_ref[...].astype(jnp.bfloat16)

    # Ping-pong offsets inside the flat [2*np_, Cp] scratch.
    r_off = pl.multiple_of((k % 2) * np_, tm)              # read slot
    w_off = pl.multiple_of(((k + 1) % 2) * np_ + row, tm)  # write slot + row

    if adj_resident:
        a_tile = adj_ref[pl.ds(row, tm), :]                 # slice resident adj
    else:
        a_tile = adj_ref[...]                               # streamed row tile

    z_full = z_ref[pl.ds(r_off, np_), :]                    # [np_, Cp] bf16
    prod = jnp.dot(a_tile, z_full, preferred_element_type=jnp.float32)
    h2_tile = h2_ref[pl.ds(row, tm), :]                     # f32 teleport term
    z_new = (1.0 - alpha) * prod + alpha * h2_tile          # [tm, Cp] f32

    z_ref[pl.ds(w_off, tm), :] = z_new.astype(jnp.bfloat16)

    # Last hop: fused, masked (padded-lane) log_softmax epilogue.
    @pl.when(k == last_hop)
    def _():
        emb_ref[pl.ds(row, tm), :] = z_new
        lane = jax.lax.broadcasted_iota(jnp.int32, z_new.shape, 1)
        valid = lane < num_classes
        neg = jnp.float32(-1e30)
        z_masked = jnp.where(valid, z_new, neg)
        z_max = jnp.max(z_masked, axis=1, keepdims=True)
        shifted = jnp.where(valid, z_new - z_max, neg)      # finite everywhere
        denom = jnp.sum(jnp.exp(shifted), axis=1, keepdims=True)
        logsm = shifted - jnp.log(denom)
        out_ref[pl.ds(row, tm), :] = jnp.where(valid, logsm, 0.0)


# ----------------------------- wrapper -------------------------------------


def _round_up(v, m):
    return ((v + m - 1) // m) * m


def _vmem_cap_bytes():
    """Generation-aware VMEM cap: 75% of physical per-core VMEM
    (~48 MiB on v7x, ~96 MiB on v5e/v6e); safe fallback if query fails."""
    cap = 64 << 20
    try:
        info = pltpu.get_tpu_info()
        cap = int(getattr(info, "vmem_capacity_bytes", cap))
    except Exception:
        pass
    return int(cap * 3 // 4)


def _choose_row_tile(np_padded):
    """Largest tile in {512, 256, 128} dividing np_padded with >= 2 tiles
    (np_padded is always a multiple of 256, so 128 always works)."""
    for t in (512, 256, 128):
        if np_padded % t == 0 and np_padded // t >= 2:
            return t
    return np_padded


def appnp_stack_forward(x, adj, params, *, K, alpha, bn_eps=1e-5):
    N, Fin = x.shape
    H = params["w1"].shape[1]
    C = params["w2"].shape[1]
    Cp = max(_round_up(C, _LANE), _LANE)     # lane-dense class dimension
    Np = _round_up(N, 256)                   # row padding: even, >=2 row tiles
    alpha = float(alpha)
    cap = _vmem_cap_bytes()

    # Zero-pad lin2 along the class dim -> padded lanes of h2/z stay 0.
    w2p = jnp.zeros((H, Cp), jnp.float32).at[:, :C].set(params["w2"])
    b2p = jnp.zeros((1, Cp), jnp.float32).at[:, :C].set(params["b2"])

    # --- prologue: lin1 -> BN -> lin2 (gridless; BN stats over the REAL N) ---
    # TODO(synk): for very large N, tile the prologue with a two-pass BatchNorm
    # (stats-reduce kernel + normalize/lin2 kernel) instead of gridless.
    pro_bytes = 4 * (x.size + params["w1"].size + 3 * H + H * Cp + Cp
                     + 3 * N * H          # h1 / centered / h1n f32 temporaries
                     + Np * Cp)           # padded output
    pro_limit = int(min(pro_bytes + (8 << 20), cap))
    h2p = pl.pallas_call(
        functools.partial(_prologue_kernel, bn_eps=float(bn_eps), n_valid=N),
        out_shape=jax.ShapeDtypeStruct((Np, Cp), jnp.float32),
        in_specs=[pl.BlockSpec(memory_space=pltpu.VMEM) for _ in range(7)],
        out_specs=pl.BlockSpec(memory_space=pltpu.VMEM),
        compiler_params=pltpu.CompilerParams(vmem_limit_bytes=pro_limit),
    )(x, params["w1"], params["b1"], params["gamma"], params["beta"],
      w2p, b2p)

    if K == 0:                       # APPNP with K=0 is the identity on h2.
        emb = h2p[:N, :C]
        return {"out": jax.nn.log_softmax(emb, axis=1), "emb": emb}

    # adj is the only O(N^2) array: bf16 halves VMEM residency & HBM traffic;
    # accumulation stays f32 on the MXU. Pad rows/cols to Np with zeros
    # (padded rows of z stay exactly 0 through propagation).
    adj_p = jnp.zeros((Np, Np), jnp.bfloat16).at[:N, :N].set(
        adj.astype(jnp.bfloat16))

    # --- fused K-hop APPNP propagation ---------------------------------------
    TM = _choose_row_tile(Np)
    # VMEM residency that is independent of the adjacency handling
    # (conservatively assume double-buffering of every pipelined block).
    fixed = (2 * Np * Cp * 4          # h2 invariant input
             + 2 * 2 * Np * Cp * 4    # emb + out invariant outputs
             + 2 * Np * Cp * 2)       # z ping-pong scratch (bf16)
    headroom = 4 << 20

    adj_resident = (2 * Np * Np * 2 + fixed + headroom) <= cap
    if adj_resident:
        adj_spec = pl.BlockSpec((Np, Np), lambda k, i: (0, 0))   # load once
        prop_limit = int(min(2 * Np * Np * 2 + fixed + headroom, cap))
        adj_bytes = Np * Np * 2
    else:
        # Stream (TM, Np) row tiles; shrink TM until the tiles fit the budget.
        while TM > 16 and (2 * TM * Np * 2 + fixed + headroom) > cap:
            TM //= 2
        adj_spec = pl.BlockSpec((TM, Np), lambda k, i: (i, 0))
        prop_limit = int(min(2 * TM * Np * 2 + fixed + headroom, cap))
        adj_bytes = K * Np * Np * 2
    nt = Np // TM
    grid = (K, nt)                    # K outer (sequential), row tiles inner

    cost = pl.CostEstimate(
        flops=2 * K * Np * Np * Cp,
        transcendentals=Np * Cp,
        bytes_accessed=adj_bytes + Np * Cp * 4 + 2 * Np * Cp * 4)

    # NOTE: both grid axes are "arbitrary": hop k+1 reads ALL rows of z written
    # during hop k from per-core VMEM scratch, so megacore row-sharding of this
    # fused call would be incorrect.
    emb_p, out_p = pl.pallas_call(
        functools.partial(_fused_prop_kernel, alpha=alpha, num_classes=C,
                          tm=TM, np_=Np, adj_resident=adj_resident),
        out_shape=(jax.ShapeDtypeStruct((Np, Cp), jnp.float32),   # emb
                   jax.ShapeDtypeStruct((Np, Cp), jnp.float32)),  # log_softmax
        grid=grid,
        in_specs=[adj_spec,
                  pl.BlockSpec((Np, Cp), lambda k, i: (0, 0))],   # h2 resident
        out_specs=(pl.BlockSpec((Np, Cp), lambda k, i: (0, 0)),   # written once
                   pl.BlockSpec((Np, Cp), lambda k, i: (0, 0))),
        scratch_shapes=[pltpu.VMEM((2 * Np, Cp), jnp.bfloat16)],  # z ping-pong
        compiler_params=pltpu.CompilerParams(
            dimension_semantics=("arbitrary", "arbitrary"),
            vmem_limit_bytes=prop_limit),
        cost_estimate=cost,
    )(adj_p, h2p)

    # Slice padded rows/lanes back to the real node/class dimensions.
    return {"out": out_p[:N, :C], "emb": emb_p[:N, :C]}


# ------------------------- graph / param helpers ----------------------------


def build_normalized_adjacency(edge_index, num_nodes):
    """Dense GCN norm: A_hat = D^-1/2 (A + I) D^-1/2. Scatter-ADD semantics so
    duplicate edges accumulate, matching PyG-style message passing.
    (Assumes the input graph has no explicit self-loops, as in PyG's
    add_self_loops=True default.)"""
    src, dst = edge_index
    a = jnp.zeros((num_nodes, num_nodes), jnp.float32)
    a = a.at[dst, src].add(1.0)                      # message src -> dst
    a = a + jnp.eye(num_nodes, dtype=jnp.float32)    # add self loops
    deg = jnp.sum(a, axis=1)
    dinv = jnp.where(deg > 0, 1.0 / jnp.sqrt(deg), 0.0)
    return dinv[:, None] * a * dinv[None, :]


def init_params(key, input_dim, hidden_unit, output_dim):
    k1, k2, k3, k4 = jax.random.split(key, 4)
    bound1 = 1.0 / jnp.sqrt(input_dim)
    bound2 = 1.0 / jnp.sqrt(hidden_unit)
    return {
        "w1": jax.random.uniform(k1, (input_dim, hidden_unit), jnp.float32,
                                 -bound1, bound1),
        "b1": jax.random.uniform(k2, (1, hidden_unit), jnp.float32,
                                 -bound1, bound1),
        "gamma": jnp.ones((1, hidden_unit), jnp.float32),
        "beta": jnp.zeros((1, hidden_unit), jnp.float32),
        "w2": jax.random.uniform(k3, (hidden_unit, output_dim), jnp.float32,
                                 -bound2, bound2),
        "b2": jax.random.uniform(k4, (1, output_dim), jnp.float32,
                                 -bound2, bound2),
    }


def _reference_forward(x, adj, params, *, K, alpha, bn_eps=1e-5):
    """Pure-JAX f32 reference of APPNPStack.forward (for tolerance check)."""
    h1 = x @ params["w1"] + params["b1"]
    mean = jnp.mean(h1, axis=0, keepdims=True)
    var = jnp.mean((h1 - mean) ** 2, axis=0, keepdims=True)
    h1n = params["gamma"] * (h1 - mean) / jnp.sqrt(var + bn_eps) + params["beta"]
    h2 = h1n @ params["w2"] + params["b2"]
    z = h2
    for _ in range(K):
        z = (1.0 - alpha) * (adj @ z) + alpha * h2
    return {"out": jax.nn.log_softmax(z, axis=1), "emb": z}


if __name__ == "__main__":
    N = 64            # number of graph nodes
    INPUT_DIM = 16
    HIDDEN = 32
    OUTPUT_DIM = 8
    K = 4
    ALPHA = 0.1

    key = jax.random.PRNGKey(0)
    k_x, k_e, k_p = jax.random.split(key, 3)

    x = jax.random.normal(k_x, (N, INPUT_DIM), jnp.float32)

    # Deterministic undirected graph: ring edges + a few random chords.
    idx = jnp.arange(N)
    ring_src = jnp.concatenate([idx, (idx + 1) % N])
    ring_dst = jnp.concatenate([(idx + 1) % N, idx])
    rnd = jax.random.randint(k_e, (2, 32), 0, N)
    src = jnp.concatenate([ring_src, rnd[0], rnd[1]])
    dst = jnp.concatenate([ring_dst, rnd[1], rnd[0]])
    edge_index = jnp.stack([src, dst])          # [2, E]

    adj = build_normalized_adjacency(edge_index, N)
    params = init_params(k_p, INPUT_DIM, HIDDEN, OUTPUT_DIM)

    result = appnp_stack_forward(x, adj, params, K=K, alpha=ALPHA)
    jax.block_until_ready(result)

    assert result["out"].shape == (N, OUTPUT_DIM)
    assert result["emb"].shape == (N, OUTPUT_DIM)

    # log_softmax rows should (approximately) sum to 1 after exp.
    row_sums = jnp.sum(jnp.exp(result["out"]), axis=1)
    assert bool(jnp.all(jnp.abs(row_sums - 1.0) < 1e-4))

    # Loose elementwise parity vs the f32 reference (bf16 adjacency / z carry).
    ref = _reference_forward(x, adj, params, K=K, alpha=ALPHA)
    assert bool(jnp.max(jnp.abs(result["emb"] - ref["emb"])) < 5e-2)
    assert bool(jnp.max(jnp.abs(result["out"] - ref["out"])) < 5e-2)

    print("KERNEL_OK")
</pallas_src>

<mosaic_0001>
module attributes {stable_mosaic.version = 11 : i64} {
  func.func @_prologue_kernel(%arg0: memref<64x16xf32, #tpu.memory_space<vmem>>, %arg1: memref<16x32xf32, #tpu.memory_space<vmem>>, %arg2: memref<1x32xf32, #tpu.memory_space<vmem>>, %arg3: memref<1x32xf32, #tpu.memory_space<vmem>>, %arg4: memref<1x32xf32, #tpu.memory_space<vmem>>, %arg5: memref<32x128xf32, #tpu.memory_space<vmem>>, %arg6: memref<1x128xf32, #tpu.memory_space<vmem>>, %arg7: memref<256x128xf32, #tpu.memory_space<vmem>>) attributes {dimension_semantics = [], scalar_prefetch = 0 : i64, scratch_operands = 0 : i64, tpu.core_type = #tpu.core_type<tc>} {
    %c0 = arith.constant 0 : index
    %c0_0 = arith.constant 0 : index
    %0 = vector.load %arg0[%c0, %c0_0] : memref<64x16xf32, #tpu.memory_space<vmem>>, vector<64x16xf32>
    %c0_1 = arith.constant 0 : index
    %c0_2 = arith.constant 0 : index
    %1 = vector.load %arg1[%c0_1, %c0_2] : memref<16x32xf32, #tpu.memory_space<vmem>>, vector<16x32xf32>
    %cst = arith.constant dense<0.000000e+00> : vector<64x32xf32>
    %2 = tpu.matmul %0, %1, %cst {dimension_numbers = #tpu.dot_dimension_numbers<[1], [0], [0], [1], [0, 0, 1, 1], [], []>} : vector<64x16xf32>, vector<16x32xf32>, vector<64x32xf32> -> vector<64x32xf32>
    %c0_3 = arith.constant 0 : index
    %c0_4 = arith.constant 0 : index
    %3 = vector.load %arg2[%c0_3, %c0_4] : memref<1x32xf32, #tpu.memory_space<vmem>>, vector<1x32xf32>
    %4 = vector.broadcast %3 : vector<1x32xf32> to vector<64x32xf32>
    %5 = arith.addf %2, %4 : vector<64x32xf32>
    %cst_5 = arith.constant dense<0.000000e+00> : vector<32xf32>
    %6 = vector.multi_reduction <add>, %5, %cst_5 [0] : vector<64x32xf32> to vector<32xf32>
    %7 = vector.shape_cast %6 : vector<32xf32> to vector<1x32xf32>
    %cst_6 = arith.constant 6.400000e+01 : f32
    %8 = vector.broadcast %cst_6 : f32 to vector<1x32xf32>
    %9 = arith.divf %7, %8 : vector<1x32xf32>
    %10 = vector.broadcast %9 : vector<1x32xf32> to vector<64x32xf32>
    %11 = arith.subf %5, %10 : vector<64x32xf32>
    %12 = arith.mulf %11, %11 : vector<64x32xf32>
    %cst_7 = arith.constant dense<0.000000e+00> : vector<32xf32>
    %13 = vector.multi_reduction <add>, %12, %cst_7 [0] : vector<64x32xf32> to vector<32xf32>
    %14 = vector.shape_cast %13 : vector<32xf32> to vector<1x32xf32>
    %cst_8 = arith.constant 6.400000e+01 : f32
    %15 = vector.broadcast %cst_8 : f32 to vector<1x32xf32>
    %16 = arith.divf %14, %15 : vector<1x32xf32>
    %c0_9 = arith.constant 0 : index
    %c0_10 = arith.constant 0 : index
    %17 = vector.load %arg3[%c0_9, %c0_10] : memref<1x32xf32, #tpu.memory_space<vmem>>, vector<1x32xf32>
    %18 = vector.broadcast %17 : vector<1x32xf32> to vector<64x32xf32>
    %19 = arith.mulf %18, %11 : vector<64x32xf32>
    %cst_11 = arith.constant 9.99999974E-6 : f32
    %20 = vector.broadcast %cst_11 : f32 to vector<1x32xf32>
    %21 = arith.addf %16, %20 : vector<1x32xf32>
    %22 = math.rsqrt %21 : vector<1x32xf32>
    %23 = vector.broadcast %22 : vector<1x32xf32> to vector<64x32xf32>
    %24 = arith.mulf %19, %23 : vector<64x32xf32>
    %c0_12 = arith.constant 0 : index
    %c0_13 = arith.constant 0 : index
    %25 = vector.load %arg4[%c0_12, %c0_13] : memref<1x32xf32, #tpu.memory_space<vmem>>, vector<1x32xf32>
    %26 = vector.broadcast %25 : vector<1x32xf32> to vector<64x32xf32>
    %27 = arith.addf %24, %26 : vector<64x32xf32>
    %c0_14 = arith.constant 0 : index
    %c0_15 = arith.constant 0 : index
    %28 = vector.load %arg5[%c0_14, %c0_15] : memref<32x128xf32, #tpu.memory_space<vmem>>, vector<32x128xf32>
    %cst_16 = arith.constant dense<0.000000e+00> : vector<64x128xf32>
    %29 = tpu.matmul %27, %28, %cst_16 {dimension_numbers = #tpu.dot_dimension_numbers<[1], [0], [0], [1], [0, 0, 1, 1], [], []>} : vector<64x32xf32>, vector<32x128xf32>, vector<64x128xf32> -> vector<64x128xf32>
    %c0_17 = arith.constant 0 : index
    %c0_18 = arith.constant 0 : index
    %30 = vector.load %arg6[%c0_17, %c0_18] : memref<1x128xf32, #tpu.memory_space<vmem>>, vector<1x128xf32>
    %31 = vector.broadcast %30 : vector<1x128xf32> to vector<64x128xf32>
    %32 = arith.addf %29, %31 : vector<64x128xf32>
    %cst_19 = arith.constant 0.000000e+00 : f32
    %33 = vector.broadcast %cst_19 : f32 to vector<256x128xf32>
    %c0_20 = arith.constant 0 : index
    %c0_21 = arith.constant 0 : index
    %34 = vector.load %arg7[%c0_20, %c0_21] : memref<256x128xf32, #tpu.memory_space<vmem>>, vector<256x128xf32>
    tpu.vector_store %arg7[%c0_20, %c0_21], %33 {strides = array<i32>} : memref<256x128xf32, #tpu.memory_space<vmem>>, vector<256x128xf32>,
    %c0_22 = arith.constant 0 : index
    %c0_23 = arith.constant 0 : index
    %35 = vector.load %arg7[%c0_22, %c0_23] : memref<256x128xf32, #tpu.memory_space<vmem>>, vector<64x128xf32>
    tpu.vector_store %arg7[%c0_22, %c0_23], %32 {strides = array<i32>} : memref<256x128xf32, #tpu.memory_space<vmem>>, vector<64x128xf32>,
    return
  }
}

</mosaic_0001>

<llo_original>
// kernel: tpu_custom_call.1
$region0: #{tpu_custom_call.1}
  #allocation0 [shape = 'u32[]', space=smem, size = 0x4, offset = 0x4, fixed_abs, tag = 'smem constant byte address 0x4 - core index']
  #allocation1 [shape = 'u32[144,128]{1,0:T(1,128)}', space=vmem, size = 0x12000, scoped, tag = 'internal scratch']
  %s0 = inlined_call_operand.vmem [shape: f32[64,16], index: 0, kind: input, shape index: {}]
  %s1 = inlined_call_operand.vmem [shape: f32[16,32], index: 1, kind: input, shape index: {}]
  %s2 = inlined_call_operand.vmem [shape: f32[1,32], index: 2, kind: input, shape index: {}]
  %s3 = inlined_call_operand.vmem [shape: f32[1,32], index: 3, kind: input, shape index: {}]
  %s4 = inlined_call_operand.vmem [shape: f32[1,32], index: 4, kind: input, shape index: {}]
  %s5 = inlined_call_operand.vmem [shape: f32[32,128], index: 5, kind: input, shape index: {}]
  %s6 = inlined_call_operand.vmem [shape: f32[1,128], index: 6, kind: input, shape index: {}]
  %s7 = inlined_call_operand.hbm [shape: f32[256,128], index: 7, kind: output, shape index: {}]
  %s8 = sld [smem:[#allocation0]]
  $region38: #{tpu_custom_call.1} parent=0
    _
  %s10 = ssub.s32 1, %s8
  %s11 = scalar_select 0, %s10, %s8
  $region1: #{tpu_custom_call.1} parent=0
    #allocation2 [shape = 'u8[131072]{0}', space=vmem, size = 0x20000, scoped, tag = 'output window, operand 0, single buffered']
    #allocation3 [shape = 's32[1]{0}', space=sflag, size = 0x4, scoped, tag = 'scoped memory for tpu_custom_call.1']
    %12 = vsyncpa [#allocation3], 0
    // Predicated region
    $region2: #{tpu_custom_call.1} parent=1 // pred_check
      _
    $region3: #{tpu_custom_call.1} parent=1 // pred_check_branch
      %14 = sbr.rel (0) target = $region5
    $region4: #{tpu_custom_call.1} parent=1 // pred_region
      _
    $region5: #{tpu_custom_call.1} parent=1 // pred_fallthru
      _
    // Predicated region
    $region6: #{tpu_custom_call.1} parent=1 // pred_check
      _
    $region7: #{tpu_custom_call.1} parent=1 // pred_check_branch
      %16 = sbr.rel (0) target = $region9
    $region8: #{tpu_custom_call.1} parent=1 // pred_region
      _
    $region9: #{tpu_custom_call.1} parent=1 // pred_fallthru
      _
    // Predicated region
    $region10: #{tpu_custom_call.1} parent=1 // pred_check
      _
    $region11: #{tpu_custom_call.1} parent=1 // pred_check_branch
      %18 = sbr.rel (0) target = $region13
    $region12: #{tpu_custom_call.1} parent=1 // pred_region
      _
    $region13: #{tpu_custom_call.1} parent=1 // pred_fallthru
      _
    // Predicated region
    $region14: #{tpu_custom_call.1} parent=1 // pred_check
      _
    $region15: #{tpu_custom_call.1} parent=1 // pred_check_branch
      %20 = sbr.rel (0) target = $region17
    $region16: #{tpu_custom_call.1} parent=1 // pred_region
      _
    $region17: #{tpu_custom_call.1} parent=1 // pred_fallthru
      _
    // Predicated region
    $region18: #{tpu_custom_call.1} parent=1 // pred_check
      _
    $region19: #{tpu_custom_call.1} parent=1 // pred_check_branch
      %22 = sbr.rel (0) target = $region21
    $region20: #{tpu_custom_call.1} parent=1 // pred_region
      _
    $region21: #{tpu_custom_call.1} parent=1 // pred_fallthru
      _
    // Predicated region
    $region22: #{tpu_custom_call.1} parent=1 // pred_check
      _
    $region23: #{tpu_custom_call.1} parent=1 // pred_check_branch
      %24 = sbr.rel (0) target = $region25
    $region24: #{tpu_custom_call.1} parent=1 // pred_region
      _
    $region25: #{tpu_custom_call.1} parent=1 // pred_fallthru
      _
    // Predicated region
    $region26: #{tpu_custom_call.1} parent=1 // pred_check
      _
    $region27: #{tpu_custom_call.1} parent=1 // pred_check_branch
      %26 = sbr.rel (0) target = $region29
    $region28: #{tpu_custom_call.1} parent=1 // pred_region
      _
    $region29: #{tpu_custom_call.1} parent=1 // pred_fallthru
      _
    %v27 = vld [vmem:[%s0] sm:$0xff]
    %v28 = vld [vmem:[%s0 + $0x8] sm:$0xff]
    %v29 = vld [vmem:[%s0 + $0x10] sm:$0xff]
    %v30 = vld [vmem:[%s0 + $0x18] sm:$0xff]
    %v31 = vld [vmem:[%s0 + $0x20] sm:$0xff]
    %v32 = vld [vmem:[%s0 + $0x28] sm:$0xff]
    %v33 = vld [vmem:[%s0 + $0x30] sm:$0xff]
    %v34 = vld [vmem:[%s0 + $0x38] sm:$0xff]
    %v35 = vld [vmem:[%s1] sm:$0xff]
    %v36 = vld [vmem:[%s1 + $0x8] sm:$0xff]
    %v37 = vld [vmem:[%s2] sm:$0x1]
    %v39 = vlaneseq
    %v40 = vshrl.u32 %v39, 7
    %v41 = vsub.s32 0, %v40
    %v42 = vrot.slane %v37, %v41
    %vm44 = vcmask 130048
    %v46 = vsel %vm44, %v27, 0
    %v49 = vsel %vm44, %v28, 0
    %v52 = vsel %vm44, %v29, 0
    %v55 = vsel %vm44, %v30, 0
    %v58 = vsel %vm44, %v31, 0
    %v61 = vsel %vm44, %v32, 0
    %v64 = vsel %vm44, %v33, 0
    %v67 = vsel %vm44, %v34, 0
    %69 = vmatprep.subr.mxu0 0.0
    %70 = vmatpush1.msra.mxu0 %v35
    %71 = vmatprep.subr.mxu0 0.0
    %72 = vmatpush1.msra.mxu0 %v36
    %73 = vmatprep.subr.mxu0 0.0
    %74 = vmatpush1.msra.mxu0 0.0
    %75 = vmatprep.subr.mxu0 0.0
    %76 = vmatpush1.msra.mxu0 0.0
    %77 = vmatprep.subr.mxu0 0.0
    %78 = vmatpush1.msra.mxu0 0.0
    %79 = vmatprep.subr.mxu0 0.0
    %80 = vmatpush1.msra.mxu0 0.0
    %81 = vmatprep.subr.mxu0 0.0
    %82 = vmatpush1.msra.mxu0 0.0
    %83 = vmatprep.subr.mxu0 0.0
    %84 = vmatpush1.msra.mxu0 0.0
    %85 = vmatprep.subr.mxu0 0.0
    %86 = vmatpush1.msra.mxu0 0.0
    %87 = vmatprep.subr.mxu0 0.0
    %88 = vmatpush1.msra.mxu0 0.0
    %89 = vmatprep.subr.mxu0 0.0
    %90 = vmatpush1.msra.mxu0 0.0
    %91 = vmatprep.subr.mxu0 0.0
    %92 = vmatpush1.msra.mxu0 0.0
    %93 = vmatprep.subr.mxu0 0.0
    %94 = vmatpush1.msra.mxu0 0.0
    %95 = vmatprep.subr.mxu0 0.0
    %96 = vmatpush1.msra.mxu0 0.0
    %97 = vmatprep.subr.mxu0 0.0
    %98 = vmatpush1.msra.mxu0 0.0
    %99 = vmatprep.subr.mxu0 0.0
    %100 = vmatpush1.msra.mxu0 0.0
    %101 = vmatprep.subr.mxu0 0.0
    %102 = vmatpush1.msra.mxu0 0.0
    %103 = vmatprep.subr.mxu0 0.0
    %104 = vmatpush1.msra.mxu0 0.0
    %105 = vmatprep.subr.mxu0 0.0
    %106 = vmatpush1.msra.mxu0 0.0
    %107 = vmatprep.subr.mxu0 0.0
    %108 = vmatpush1.msra.mxu0 0.0
    %109 = vmatprep.subr.mxu0 0.0
    %110 = vmatpush1.msra.mxu0 0.0
    %111 = vmatprep.subr.mxu0 0.0
    %112 = vmatpush1.msra.mxu0 0.0
    %113 = vmatprep.subr.mxu0 0.0
    %114 = vmatpush1.msra.mxu0 0.0
    %115 = vmatprep.subr.mxu0 0.0
    %116 = vmatpush1.msra.mxu0 0.0
    %117 = vmatprep.subr.mxu0 0.0
    %118 = vmatpush1.msra.mxu0 0.0
    %119 = vmatprep.subr.mxu0 0.0
    %120 = vmatpush1.msra.mxu0 0.0
    %121 = vmatprep.subr.mxu0 0.0
    %122 = vmatpush1.msra.mxu0 0.0
    %123 = vmatprep.subr.mxu0 0.0
    %124 = vmatpush1.msra.mxu0 0.0
    %125 = vmatprep.subr.mxu0 0.0
    %126 = vmatpush1.msra.mxu0 0.0
    %127 = vmatprep.subr.mxu0 0.0
    %128 = vmatpush1.msra.mxu0 0.0
    %129 = vmatprep.subr.mxu0 0.0
    %130 = vmatpush1.msra.mxu0 0.0
    %131 = vmatprep.subr.mxu0 0.0
    %132 = vmatpush1.msra.mxu0 0.0
    %133 = vmatprep.mubr.f32.mxu0 0.0
    %134 = vmatmul.mubr.f32.gmra.mrb[0].mxu0 %v46
    %v135 = vpop.f32.mrb[0].mxu0
    %v136 = vadd.f32 %v42, %v135
    %v137 = vpop.f32.mrb[0].mxu0
    %138 = vmatprep.mubr.f32.mxu0 0.0
    %139 = vmatmul.mubr.f32.gmra.mrb[0].mxu0 %v49
    %v140 = vpop.f32.mrb[0].mxu0
    %v141 = vadd.f32 %v42, %v140
    %v142 = vpop.f32.mrb[0].mxu0
    %143 = vmatprep.mubr.f32.mxu0 0.0
    %144 = vmatmul.mubr.f32.gmra.mrb[0].mxu0 %v52
    %v145 = vpop.f32.mrb[0].mxu0
    %v146 = vadd.f32 %v42, %v145
    %v147 = vpop.f32.mrb[0].mxu0
    %148 = vmatprep.mubr.f32.mxu0 0.0
    %149 = vmatmul.mubr.f32.gmra.mrb[0].mxu0 %v55
    %v150 = vpop.f32.mrb[0].mxu0
    %v151 = vadd.f32 %v42, %v150
    %v152 = vpop.f32.mrb[0].mxu0
    %153 = vmatprep.mubr.f32.mxu0 0.0
    %154 = vmatmul.mubr.f32.gmra.mrb[0].mxu0 %v58
    %v155 = vpop.f32.mrb[0].mxu0
    %v156 = vadd.f32 %v42, %v155
    %v157 = vpop.f32.mrb[0].mxu0
    %158 = vmatprep.mubr.f32.mxu0 0.0
    %159 = vmatmul.mubr.f32.gmra.mrb[0].mxu0 %v61
    %v160 = vpop.f32.mrb[0].mxu0
    %v161 = vadd.f32 %v42, %v160
    %v162 = vpop.f32.mrb[0].mxu0
    %163 = vmatprep.mubr.f32.mxu0 0.0
    %164 = vmatmul.mubr.f32.gmra.mrb[0].mxu0 %v64
    %v165 = vpop.f32.mrb[0].mxu0
    %v166 = vadd.f32 %v42, %v165
    %v167 = vpop.f32.mrb[0].mxu0
    %168 = vmatprep.mubr.f32.mxu0 0.0
    %169 = vmatmul.mubr.f32.gmra.mrb[0].mxu0 %v67
    %v170 = vpop.f32.mrb[0].mxu0
    %v171 = vadd.f32 %v42, %v170
    %v172 = vpop.f32.mrb[0].mxu0
    %173 = vdwg.mxu0
    %vm174 = vcmask 261120
    %v175 = vsel %vm174, %v136, 0.0
    %v176 = vsel %vm174, %v141, 0.0
    %v177 = vadd.f32 %v175, %v176
    %v178 = vsel %vm174, %v146, 0.0
    %v179 = vadd.f32 %v177, %v178
    %v180 = vsel %vm174, %v151, 0.0
    %v181 = vadd.f32 %v179, %v180
    %v182 = vsel %vm174, %v156, 0.0
    %v183 = vadd.f32 %v181, %v182
    %v184 = vsel %vm174, %v161, 0.0
    %v185 = vadd.f32 %v183, %v184
    %v186 = vsel %vm174, %v166, 0.0
    %v187 = vadd.f32 %v185, %v186
    %v188 = vsel %vm174, %v171, 0.0
    %v189 = vadd.f32 %v187, %v188
    %v190 = vrot.slane %v189, 4
    %v191 = vadd.f32 %v189, %v190
    %v192 = vrot.slane %v191, 2
    %v193 = vadd.f32 %v191, %v192
    %v194 = vrot.slane %v193, 1
    %v195 = vadd.f32 %v193, %v194
    %v196 = vrcp.pop 64.0
    %v197 = vmul.f32 %v195, %v196
    %v198 = vsub.f32 %v136, %v197
    %v199 = vsub.f32 %v141, %v197
    %v200 = vsub.f32 %v146, %v197
    %v201 = vsub.f32 %v151, %v197
    %v202 = vsub.f32 %v156, %v197
    %v203 = vsub.f32 %v161, %v197
    %v204 = vsub.f32 %v166, %v197
    %v205 = vsub.f32 %v171, %v197
    %v206 = vmul.f32 %v198, %v198
    %v207 = vmul.f32 %v199, %v199
    %v208 = vmul.f32 %v200, %v200
    %v209 = vmul.f32 %v201, %v201
    %v210 = vmul.f32 %v202, %v202
    %v211 = vmul.f32 %v203, %v203
    %v212 = vmul.f32 %v204, %v204
    %v213 = vmul.f32 %v205, %v205
    %v214 = vsel %vm174, %v206, 0.0
    %v215 = vsel %vm174, %v207, 0.0
    %v216 = vadd.f32 %v214, %v215
    %v217 = vsel %vm174, %v208, 0.0
    %v218 = vadd.f32 %v216, %v217
    %v219 = vsel %vm174, %v209, 0.0
    %v220 = vadd.f32 %v218, %v219
    %v221 = vsel %vm174, %v210, 0.0
    %v222 = vadd.f32 %v220, %v221
    %v223 = vsel %vm174, %v211, 0.0
    %v224 = vadd.f32 %v222, %v223
    %v225 = vsel %vm174, %v212, 0.0
    %v226 = vadd.f32 %v224, %v225
    %v227 = vsel %vm174, %v213, 0.0
    %v228 = vadd.f32 %v226, %v227
    %v229 = vrot.slane %v228, 4
    %v230 = vadd.f32 %v228, %v229
    %v231 = vrot.slane %v230, 2
    %v232 = vadd.f32 %v230, %v231
    %v233 = vrot.slane %v232, 1
    %v234 = vadd.f32 %v232, %v233
    %v235 = vmul.f32 %v234, %v196
    %v236 = vld [vmem:[%s3] sm:$0x1]
    %v238 = vlaneseq
    %v239 = vshrl.u32 %v238, 7
    %v240 = vsub.s32 0, %v239
    %v241 = vrot.slane %v236, %v240
    %v243 = vmul.f32 %v241, %v198
    %v244 = vmul.f32 %v241, %v199
    %v245 = vmul.f32 %v241, %v200
    %v246 = vmul.f32 %v241, %v201
    %v247 = vmul.f32 %v241, %v202
    %v248 = vmul.f32 %v241, %v203
    %v249 = vmul.f32 %v241, %v204
    %v250 = vmul.f32 %v241, %v205
    %v251 = vadd.f32 %v235, 1e-05
    %v252 = vrsqrt.pop %v251
    %v253 = vmul.f32 %v243, %v252
    %v254 = vmul.f32 %v244, %v252
    %v255 = vmul.f32 %v245, %v252
    %v256 = vmul.f32 %v246, %v252
    %v257 = vmul.f32 %v247, %v252
    %v258 = vmul.f32 %v248, %v252
    %v259 = vmul.f32 %v249, %v252
    %v260 = vmul.f32 %v250, %v252
    %v261 = vld [vmem:[%s4] sm:$0x1]
    %v263 = vlaneseq
    %v264 = vshrl.u32 %v263, 7
    %v265 = vsub.s32 0, %v264
    %v266 = vrot.slane %v261, %v265
    %v268 = vadd.f32 %v253, %v266
    %v269 = vadd.f32 %v254, %v266
    %v270 = vadd.f32 %v255, %v266
    %v271 = vadd.f32 %v256, %v266
    %v272 = vadd.f32 %v257, %v266
    %v273 = vadd.f32 %v258, %v266
    %v274 = vadd.f32 %v259, %v266
    %v275 = vadd.f32 %v260, %v266
    %v276 = vld [vmem:[%s5] sm:$0xff]
    %v277 = vld [vmem:[%s5 + $0x8] sm:$0xff]
    %v278 = vld [vmem:[%s5 + $0x10] sm:$0xff]
    %v279 = vld [vmem:[%s5 + $0x18] sm:$0xff]
    %v280 = vld [vmem:[%s6] sm:$0x1]
    %v282 = vlaneseq
    %v283 = vshrl.u32 %v282, 7
    %v284 = vsub.s32 0, %v283
    %v285 = vrot.slane %v280, %v284
    %v288 = vsel %vm174, %v268, 0
    %v291 = vsel %vm174, %v269, 0
    %v294 = vsel %vm174, %v270, 0
    %v297 = vsel %vm174, %v271, 0
    %v300 = vsel %vm174, %v272, 0
    %v303 = vsel %vm174, %v273, 0
    %v306 = vsel %vm174, %v274, 0
    %v309 = vsel %vm174, %v275, 0
    %311 = vmatprep.subr.mxu0 0.0
    %312 = vmatpush1.msra.mxu0 %v276
    %313 = vmatprep.subr.mxu0 0.0
    %314 = vmatpush1.msra.mxu0 %v277
    %315 = vmatprep.subr.mxu0 0.0
    %316 = vmatpush1.msra.mxu0 %v278
    %317 = vmatprep.subr.mxu0 0.0
    %318 = vmatpush1.msra.mxu0 %v279
    %319 = vmatprep.subr.mxu0 0.0
    %320 = vmatpush1.msra.mxu0 0.0
    %321 = vmatprep.subr.mxu0 0.0
    %322 = vmatpush1.msra.mxu0 0.0
    %323 = vmatprep.subr.mxu0 0.0
    %324 = vmatpush1.msra.mxu0 0.0
    %325 = vmatprep.subr.mxu0 0.0
    %326 = vmatpush1.msra.mxu0 0.0
    %327 = vmatprep.subr.mxu0 0.0
    %328 = vmatpush1.msra.mxu0 0.0
    %329 = vmatprep.subr.mxu0 0.0
    %330 = vmatpush1.msra.mxu0 0.0
    %331 = vmatprep.subr.mxu0 0.0
    %332 = vmatpush1.msra.mxu0 0.0
    %333 = vmatprep.subr.mxu0 0.0
    %334 = vmatpush1.msra.mxu0 0.0
    %335 = vmatprep.subr.mxu0 0.0
    %336 = vmatpush1.msra.mxu0 0.0
    %337 = vmatprep.subr.mxu0 0.0
    %338 = vmatpush1.msra.mxu0 0.0
    %339 = vmatprep.subr.mxu0 0.0
    %340 = vmatpush1.msra.mxu0 0.0
    %341 = vmatprep.subr.mxu0 0.0
    %342 = vmatpush1.msra.mxu0 0.0
    %343 = vmatprep.subr.mxu0 0.0
    %344 = vmatpush1.msra.mxu0 0.0
    %345 = vmatprep.subr.mxu0 0.0
    %346 = vmatpush1.msra.mxu0 0.0
    %347 = vmatprep.subr.mxu0 0.0
    %348 = vmatpush1.msra.mxu0 0.0
    %349 = vmatprep.subr.mxu0 0.0
    %350 = vmatpush1.msra.mxu0 0.0
    %351 = vmatprep.subr.mxu0 0.0
    %352 = vmatpush1.msra.mxu0 0.0
    %353 = vmatprep.subr.mxu0 0.0
    %354 = vmatpush1.msra.mxu0 0.0
    %355 = vmatprep.subr.mxu0 0.0
    %356 = vmatpush1.msra.mxu0 0.0
    %357 = vmatprep.subr.mxu0 0.0
    %358 = vmatpush1.msra.mxu0 0.0
    %359 = vmatprep.subr.mxu0 0.0
    %360 = vmatpush1.msra.mxu0 0.0
    %361 = vmatprep.subr.mxu0 0.0
    %362 = vmatpush1.msra.mxu0 0.0
    %363 = vmatprep.subr.mxu0 0.0
    %364 = vmatpush1.msra.mxu0 0.0
    %365 = vmatprep.subr.mxu0 0.0
    %366 = vmatpush1.msra.mxu0 0.0
    %367 = vmatprep.subr.mxu0 0.0
    %368 = vmatpush1.msra.mxu0 0.0
    %369 = vmatprep.subr.mxu0 0.0
    %370 = vmatpush1.msra.mxu0 0.0
    %371 = vmatprep.subr.mxu0 0.0
    %372 = vmatpush1.msra.mxu0 0.0
    %373 = vmatprep.subr.mxu0 0.0
    %374 = vmatpush1.msra.mxu0 0.0
    %375 = vmatprep.mubr.f32.mxu0 0.0
    %376 = vmatmul.mubr.f32.gmra.mrb[0].mxu0 %v288
    %v377 = vpop.f32.mrb[0].mxu0
    %v378 = vadd.f32 %v285, %v377
    %v379 = vpop.f32.mrb[0].mxu0
    %380 = vmatprep.mubr.f32.mxu0 0.0
    %381 = vmatmul.mubr.f32.gmra.mrb[0].mxu0 %v291
    %v382 = vpop.f32.mrb[0].mxu0
    %v383 = vadd.f32 %v285, %v382
    %v384 = vpop.f32.mrb[0].mxu0
    %385 = vmatprep.mubr.f32.mxu0 0.0
    %386 = vmatmul.mubr.f32.gmra.mrb[0].mxu0 %v294
    %v387 = vpop.f32.mrb[0].mxu0
    %v388 = vadd.f32 %v285, %v387
    %v389 = vpop.f32.mrb[0].mxu0
    %390 = vmatprep.mubr.f32.mxu0 0.0
    %391 = vmatmul.mubr.f32.gmra.mrb[0].mxu0 %v297
    %v392 = vpop.f32.mrb[0].mxu0
    %v393 = vadd.f32 %v285, %v392
    %v394 = vpop.f32.mrb[0].mxu0
    %395 = vmatprep.mubr.f32.mxu0 0.0
    %396 = vmatmul.mubr.f32.gmra.mrb[0].mxu0 %v300
    %v397 = vpop.f32.mrb[0].mxu0
    %v398 = vadd.f32 %v285, %v397
    %v399 = vpop.f32.mrb[0].mxu0
    %400 = vmatprep.mubr.f32.mxu0 0.0
    %401 = vmatmul.mubr.f32.gmra.mrb[0].mxu0 %v303
    %v402 = vpop.f32.mrb[0].mxu0
    %v403 = vadd.f32 %v285, %v402
    %v404 = vpop.f32.mrb[0].mxu0
    %405 = vmatprep.mubr.f32.mxu0 0.0
    %406 = vmatmul.mubr.f32.gmra.mrb[0].mxu0 %v306
    %v407 = vpop.f32.mrb[0].mxu0
    %v408 = vadd.f32 %v285, %v407
    %v409 = vpop.f32.mrb[0].mxu0
    %410 = vmatprep.mubr.f32.mxu0 0.0
    %411 = vmatmul.mubr.f32.gmra.mrb[0].mxu0 %v309
    %v412 = vpop.f32.mrb[0].mxu0
    %v413 = vadd.f32 %v285, %v412
    %v414 = vpop.f32.mrb[0].mxu0
    %415 = vdwg.mxu0
    %416 = vst [vmem:[#allocation2] sm:$0xff] 0.0
    %417 = vst [vmem:[#allocation2 + $0x8] sm:$0xff] 0.0
    %418 = vst [vmem:[#allocation2 + $0x10] sm:$0xff] 0.0
    %419 = vst [vmem:[#allocation2 + $0x18] sm:$0xff] 0.0
    %420 = vst [vmem:[#allocation2 + $0x20] sm:$0xff] 0.0
    %421 = vst [vmem:[#allocation2 + $0x28] sm:$0xff] 0.0
    %422 = vst [vmem:[#allocation2 + $0x30] sm:$0xff] 0.0
    %423 = vst [vmem:[#allocation2 + $0x38] sm:$0xff] 0.0
    %424 = vst [vmem:[#allocation2 + $0x40] sm:$0xff] 0.0
    %425 = vst [vmem:[#allocation2 + $0x48] sm:$0xff] 0.0
    %426 = vst [vmem:[#allocation2 + $0x50] sm:$0xff] 0.0
    %427 = vst [vmem:[#allocation2 + $0x58] sm:$0xff] 0.0
    %428 = vst [vmem:[#allocation2 + $0x60] sm:$0xff] 0.0
    %429 = vst [vmem:[#allocation2 + $0x68] sm:$0xff] 0.0
    %430 = vst [vmem:[#allocation2 + $0x70] sm:$0xff] 0.0
    %431 = vst [vmem:[#allocation2 + $0x78] sm:$0xff] 0.0
    %432 = vst [vmem:[#allocation2 + $0x80] sm:$0xff] 0.0
    %433 = vst [vmem:[#allocation2 + $0x88] sm:$0xff] 0.0
    %434 = vst [vmem:[#allocation2 + $0x90] sm:$0xff] 0.0
    %435 = vst [vmem:[#allocation2 + $0x98] sm:$0xff] 0.0
    %436 = vst [vmem:[#allocation2 + $0xa0] sm:$0xff] 0.0
    %437 = vst [vmem:[#allocation2 + $0xa8] sm:$0xff] 0.0
    %438 = vst [vmem:[#allocation2 + $0xb0] sm:$0xff] 0.0
    %439 = vst [vmem:[#allocation2 + $0xb8] sm:$0xff] 0.0
    %440 = vst [vmem:[#allocation2 + $0xc0] sm:$0xff] 0.0
    %441 = vst [vmem:[#allocation2 + $0xc8] sm:$0xff] 0.0
    %442 = vst [vmem:[#allocation2 + $0xd0] sm:$0xff] 0.0
    %443 = vst [vmem:[#allocation2 + $0xd8] sm:$0xff] 0.0
    %444 = vst [vmem:[#allocation2 + $0xe0] sm:$0xff] 0.0
    %445 = vst [vmem:[#allocation2 + $0xe8] sm:$0xff] 0.0
    %446 = vst [vmem:[#allocation2 + $0xf0] sm:$0xff] 0.0
    %447 = vst [vmem:[#allocation2 + $0xf8] sm:$0xff] 0.0
    %448 = vst [vmem:[#allocation2] sm:$0xff] %v378
    %449 = vst [vmem:[#allocation2 + $0x8] sm:$0xff] %v383
    %450 = vst [vmem:[#allocation2 + $0x10] sm:$0xff] %v388
    %451 = vst [vmem:[#allocation2 + $0x18] sm:$0xff] %v393
    %452 = vst [vmem:[#allocation2 + $0x20] sm:$0xff] %v398
    %453 = vst [vmem:[#allocation2 + $0x28] sm:$0xff] %v403
    %454 = vst [vmem:[#allocation2 + $0x30] sm:$0xff] %v408
    %455 = vst [vmem:[#allocation2 + $0x38] sm:$0xff] %v413
    // Predicated region
    $region30: #{tpu_custom_call.1} parent=1 // pred_check
      _
    $region31: #{tpu_custom_call.1} parent=1 // pred_check_branch
      %457 = sbr.rel (0) target = $region33
    $region32: #{tpu_custom_call.1} parent=1 // pred_region
      %s459 = ssub.s32 4096, 4096
      %460 = vsyncadd [#allocation3], %s459
      %s461 = sshll.u32 [#allocation2], 4
      %s462 = int_to_ptr.vmem [resolvable:$true] %s461
      %467 = dma.vmem_to_hbm [thread:$0]  %s462, 4096, %s7, [#allocation3], 128, 128, 8
    $region33: #{tpu_custom_call.1} parent=1 // pred_fallthru
      _
    // Predicated region
    $region34: #{tpu_custom_call.1} parent=1 // pred_check
      _
    $region35: #{tpu_custom_call.1} parent=1 // pred_check_branch
      %469 = sbr.rel (0) target = $region37
    $region36: #{tpu_custom_call.1} parent=1 // pred_region
      %470 = dma.done [#allocation3], 4096
    $region37: #{tpu_custom_call.1} parent=1 // pred_fallthru
      _
    %471 = vsyncpa [#allocation3], 1

</llo_original>
